<compile_context>
chip_gen: v5e
topology: v5e:2x2
jax: 0.10.0
libtpu: 0.0.40
codegen_flags: <defaults>
</compile_context>

<pallas_src>
import jax
import jax.numpy as jnp
from jax.experimental import pallas as pl
from jax.experimental.pallas import tpu as pltpu


def _round_up(n, m):
    return (n + m - 1) // m * m


def _mlp_kernel(x_ref,
                w1_ref, b1_ref,
                w2_ref, b2_ref,
                w3_ref, b3_ref,
                o_ref):
    """Fused (2->64) -> ReLU -> (64->64) -> ReLU -> (64->out) per batch tile."""
    x = x_ref[...]                     # (TB, 2) f32
    w1 = w1_ref[...]                   # (2, 64) f32

    # K=2 contraction on the VPU (two broadcast FMAs) -- avoids a wasted,
    # sublane-padded MXU pass for such a tiny contraction dimension.
    h = x[:, 0:1] * w1[0:1, :] + x[:, 1:2] * w1[1:2, :] + b1_ref[...]
    h = jnp.maximum(h, 0.0)            # relu

    h = jnp.dot(h, w2_ref[...], preferred_element_type=jnp.float32) + b2_ref[...]
    h = jnp.maximum(h, 0.0)            # relu

    h = jnp.dot(h, w3_ref[...], preferred_element_type=jnp.float32) + b3_ref[...]

    o_ref[...] = h.astype(o_ref.dtype)


def fold_params(params):
    """Fold the three ReLU-free Linear pairs into three fused layers."""
    (w1, b1), (w2, b2), (w3, b3), (w4, b4), (w5, b5), (wo, bo) = params
    w12 = w1 @ w2
    b12 = b1 @ w2 + b2                 # (1, 64)
    w34 = w3 @ w4
    b34 = b3 @ w4 + b4                 # (1, 64)
    w56 = w5 @ wo
    b56 = b5 @ wo + bo                 # (1, out)
    return w12, b12, w34, b34, w56, b56


def net_forward(x, params, *, batch_tile=1024, out_dtype=jnp.float32):
    """x: (batch, 2) f32. params: list of 6 (W, b) with W (in,out), b (1,out)."""
    batch, in_dim = x.shape
    assert in_dim == 2, in_dim
    out_dim = params[-1][0].shape[1]

    w12, b12, w34, b34, w56, b56 = fold_params(params)

    # Batch tiling: TB multiple of 8 sublanes.
    tb_one = _round_up(batch, 8)                      # single-step tile
    if tb_one > 8:
        # Keep >= 2 grid steps when batch allows it so both v7x TensorCores
        # get work under dimension_semantics=("parallel",).
        tb_two = _round_up((batch + 1) // 2, 8)
    else:
        tb_two = tb_one
    tb = min(batch_tile, tb_two)

    padded_batch = _round_up(batch, tb)
    if padded_batch != batch:
        x = jnp.pad(x, ((0, padded_batch - batch), (0, 0)))

    grid = (padded_batch // tb,)

    def resident(arr):
        # Full block + constant block index => stays VMEM-resident, no re-fetch.
        return pl.BlockSpec(arr.shape, lambda i: (0, 0))

    y = pl.pallas_call(
        _mlp_kernel,
        out_shape=jax.ShapeDtypeStruct((padded_batch, out_dim), out_dtype),
        grid=grid,
        in_specs=[
            pl.BlockSpec((tb, 2), lambda i: (i, 0)),     # x tile, double-buffered
            resident(w12), resident(b12),
            resident(w34), resident(b34),
            resident(w56), resident(b56),
        ],
        # Full-extent last dim (== out_dim) satisfies the (8,128) rule and
        # avoids writing zero-padded lanes to HBM.
        out_specs=pl.BlockSpec((tb, out_dim), lambda i: (i, 0)),
        compiler_params=pltpu.CompilerParams(
            dimension_semantics=("parallel",)),
    )(x, w12, b12, w34, b34, w56, b56)

    if padded_batch != batch:
        y = y[:batch]
    return y


def init_params(key, out_put):
    """Deterministic init matching the module's layer shapes.

    PyTorch nn.Linear default init: U(-1/sqrt(fan_in), 1/sqrt(fan_in)) for both
    weight and bias. Weights are stored transposed to (in, out).
    """
    dims = [(2, 32), (32, 64), (64, 128), (128, 64), (64, 32), (32, out_put)]
    params = []
    for (fan_in, fan_out) in dims:
        key, kw, kb = jax.random.split(key, 3)
        bound = 1.0 / jnp.sqrt(jnp.float32(fan_in))
        w = jax.random.uniform(kw, (fan_in, fan_out), jnp.float32, -bound, bound)
        b = jax.random.uniform(kb, (1, fan_out), jnp.float32, -bound, bound)
        params.append((w, b))
    return params


def net_forward_ref(x, params):
    """Pure-JAX reference: the original unfused 6-layer forward."""
    (w1, b1), (w2, b2), (w3, b3), (w4, b4), (w5, b5), (wo, bo) = params
    h = x @ w1 + b1
    h = h @ w2 + b2
    h = jnp.maximum(h, 0.0)
    h = h @ w3 + b3
    h = h @ w4 + b4
    h = jnp.maximum(h, 0.0)
    h = h @ w5 + b5
    h = h @ wo + bo
    return h


if __name__ == "__main__":
    key = jax.random.PRNGKey(0)
    k_params, k_x = jax.random.split(key)

    out_put = 3          # synthetic cluster-count output, as in figure2 usage
    batch = 8            # small batch of 2-D points
    params = init_params(k_params, out_put)
    x = jax.random.normal(k_x, (batch, 2), jnp.float32)

    y = net_forward(x, params)
    y = jax.block_until_ready(y)

    y_ref = net_forward_ref(x, params)
    assert y.shape == (batch, out_put), y.shape
    # Layer folding only reassociates fp math; 1e-4 tolerance covers it.
    assert jnp.allclose(y, y_ref, atol=1e-4, rtol=1e-4), "mismatch vs reference"

    print("KERNEL_OK")
</pallas_src>

<mosaic_0001>
module attributes {stable_mosaic.version = 11 : i64} {
  func.func @_mlp_kernel(%arg0: i32, %arg1: memref<8x2xf32, #tpu.memory_space<vmem>>, %arg2: memref<2x64xf32, #tpu.memory_space<vmem>>, %arg3: memref<1x64xf32, #tpu.memory_space<vmem>>, %arg4: memref<64x64xf32, #tpu.memory_space<vmem>>, %arg5: memref<1x64xf32, #tpu.memory_space<vmem>>, %arg6: memref<64x3xf32, #tpu.memory_space<vmem>>, %arg7: memref<1x3xf32, #tpu.memory_space<vmem>>, %arg8: memref<8x3xf32, #tpu.memory_space<vmem>>) attributes {dimension_semantics = [#tpu.dimension_semantics<parallel>], iteration_bounds = array<i64: 1>, scalar_prefetch = 0 : i64, scratch_operands = 0 : i64, tpu.core_type = #tpu.core_type<tc>, window_params = [{transform_indices = @transform_0, window_bounds = array<i64: 8, 2>}, {pipeline_mode = #tpu.pipeline_mode<synchronous>, transform_indices = @transform_1, window_bounds = array<i64: 2, 64>}, {pipeline_mode = #tpu.pipeline_mode<synchronous>, transform_indices = @transform_2, window_bounds = array<i64: 1, 64>}, {pipeline_mode = #tpu.pipeline_mode<synchronous>, transform_indices = @transform_3, window_bounds = array<i64: 64, 64>}, {pipeline_mode = #tpu.pipeline_mode<synchronous>, transform_indices = @transform_4, window_bounds = array<i64: 1, 64>}, {pipeline_mode = #tpu.pipeline_mode<synchronous>, transform_indices = @transform_5, window_bounds = array<i64: 64, 3>}, {pipeline_mode = #tpu.pipeline_mode<synchronous>, transform_indices = @transform_6, window_bounds = array<i64: 1, 3>}, {transform_indices = @transform_7, window_bounds = array<i64: 8, 3>}]} {
    %c0 = arith.constant 0 : index
    %c0_0 = arith.constant 0 : index
    %0 = vector.load %arg1[%c0, %c0_0] : memref<8x2xf32, #tpu.memory_space<vmem>>, vector<8x2xf32>
    %c0_1 = arith.constant 0 : index
    %c0_2 = arith.constant 0 : index
    %1 = vector.load %arg2[%c0_1, %c0_2] : memref<2x64xf32, #tpu.memory_space<vmem>>, vector<2x64xf32>
    %2 = vector.extract_strided_slice %0 {offsets = [0, 0], sizes = [8, 1], strides = [1, 1]} : vector<8x2xf32> to vector<8x1xf32>
    %3 = vector.extract_strided_slice %1 {offsets = [0, 0], sizes = [1, 64], strides = [1, 1]} : vector<2x64xf32> to vector<1x64xf32>
    %4 = vector.broadcast %2 : vector<8x1xf32> to vector<8x64xf32>
    %5 = vector.broadcast %3 : vector<1x64xf32> to vector<8x64xf32>
    %6 = arith.mulf %4, %5 : vector<8x64xf32>
    %7 = vector.extract_strided_slice %0 {offsets = [0, 1], sizes = [8, 1], strides = [1, 1]} : vector<8x2xf32> to vector<8x1xf32>
    %8 = vector.extract_strided_slice %1 {offsets = [1, 0], sizes = [1, 64], strides = [1, 1]} : vector<2x64xf32> to vector<1x64xf32>
    %9 = vector.broadcast %7 : vector<8x1xf32> to vector<8x64xf32>
    %10 = vector.broadcast %8 : vector<1x64xf32> to vector<8x64xf32>
    %11 = arith.mulf %9, %10 : vector<8x64xf32>
    %12 = arith.addf %6, %11 : vector<8x64xf32>
    %c0_3 = arith.constant 0 : index
    %c0_4 = arith.constant 0 : index
    %13 = vector.load %arg3[%c0_3, %c0_4] : memref<1x64xf32, #tpu.memory_space<vmem>>, vector<1x64xf32>
    %14 = vector.broadcast %13 : vector<1x64xf32> to vector<8x64xf32>
    %15 = arith.addf %12, %14 : vector<8x64xf32>
    %cst = arith.constant 0.000000e+00 : f32
    %16 = vector.broadcast %cst : f32 to vector<8x64xf32>
    %17 = arith.maximumf %15, %16 : vector<8x64xf32>
    %c0_5 = arith.constant 0 : index
    %c0_6 = arith.constant 0 : index
    %18 = vector.load %arg4[%c0_5, %c0_6] : memref<64x64xf32, #tpu.memory_space<vmem>>, vector<64x64xf32>
    %cst_7 = arith.constant dense<0.000000e+00> : vector<8x64xf32>
    %19 = tpu.matmul %17, %18, %cst_7 {dimension_numbers = #tpu.dot_dimension_numbers<[1], [0], [0], [1], [0, 0, 1, 1], [], []>} : vector<8x64xf32>, vector<64x64xf32>, vector<8x64xf32> -> vector<8x64xf32>
    %c0_8 = arith.constant 0 : index
    %c0_9 = arith.constant 0 : index
    %20 = vector.load %arg5[%c0_8, %c0_9] : memref<1x64xf32, #tpu.memory_space<vmem>>, vector<1x64xf32>
    %21 = vector.broadcast %20 : vector<1x64xf32> to vector<8x64xf32>
    %22 = arith.addf %19, %21 : vector<8x64xf32>
    %cst_10 = arith.constant 0.000000e+00 : f32
    %23 = vector.broadcast %cst_10 : f32 to vector<8x64xf32>
    %24 = arith.maximumf %22, %23 : vector<8x64xf32>
    %c0_11 = arith.constant 0 : index
    %c0_12 = arith.constant 0 : index
    %25 = vector.load %arg6[%c0_11, %c0_12] : memref<64x3xf32, #tpu.memory_space<vmem>>, vector<64x3xf32>
    %cst_13 = arith.constant dense<0.000000e+00> : vector<8x3xf32>
    %26 = tpu.matmul %24, %25, %cst_13 {dimension_numbers = #tpu.dot_dimension_numbers<[1], [0], [0], [1], [0, 0, 1, 1], [], []>} : vector<8x64xf32>, vector<64x3xf32>, vector<8x3xf32> -> vector<8x3xf32>
    %c0_14 = arith.constant 0 : index
    %c0_15 = arith.constant 0 : index
    %27 = vector.load %arg7[%c0_14, %c0_15] : memref<1x3xf32, #tpu.memory_space<vmem>>, vector<1x3xf32>
    %28 = vector.broadcast %27 : vector<1x3xf32> to vector<8x3xf32>
    %29 = arith.addf %26, %28 : vector<8x3xf32>
    %c0_16 = arith.constant 0 : index
    %c0_17 = arith.constant 0 : index
    %30 = vector.load %arg8[%c0_16, %c0_17] : memref<8x3xf32, #tpu.memory_space<vmem>>, vector<8x3xf32>
    tpu.vector_store %arg8[%c0_16, %c0_17], %29 {strides = array<i32>} : memref<8x3xf32, #tpu.memory_space<vmem>>, vector<8x3xf32>,
    return
  }
  func.func @transform_0(%arg0: i32) -> (i32, i32) {
    %c0_i32 = arith.constant 0 : i32
    %c0_i32_0 = arith.constant 0 : i32
    return %arg0, %c0_i32 : i32, i32
  }
  func.func @transform_1(%arg0: i32) -> (i32, i32) {
    %c0_i32 = arith.constant 0 : i32
    %c0_i32_0 = arith.constant 0 : i32
    %c0_i32_1 = arith.constant 0 : i32
    return %c0_i32, %c0_i32_0 : i32, i32
  }
  func.func @transform_2(%arg0: i32) -> (i32, i32) {
    %c0_i32 = arith.constant 0 : i32
    %c0_i32_0 = arith.constant 0 : i32
    %c0_i32_1 = arith.constant 0 : i32
    return %c0_i32, %c0_i32_0 : i32, i32
  }
  func.func @transform_3(%arg0: i32) -> (i32, i32) {
    %c0_i32 = arith.constant 0 : i32
    %c0_i32_0 = arith.constant 0 : i32
    %c0_i32_1 = arith.constant 0 : i32
    return %c0_i32, %c0_i32_0 : i32, i32
  }
  func.func @transform_4(%arg0: i32) -> (i32, i32) {
    %c0_i32 = arith.constant 0 : i32
    %c0_i32_0 = arith.constant 0 : i32
    %c0_i32_1 = arith.constant 0 : i32
    return %c0_i32, %c0_i32_0 : i32, i32
  }
  func.func @transform_5(%arg0: i32) -> (i32, i32) {
    %c0_i32 = arith.constant 0 : i32
    %c0_i32_0 = arith.constant 0 : i32
    %c0_i32_1 = arith.constant 0 : i32
    return %c0_i32, %c0_i32_0 : i32, i32
  }
  func.func @transform_6(%arg0: i32) -> (i32, i32) {
    %c0_i32 = arith.constant 0 : i32
    %c0_i32_0 = arith.constant 0 : i32
    %c0_i32_1 = arith.constant 0 : i32
    return %c0_i32, %c0_i32_0 : i32, i32
  }
  func.func @transform_7(%arg0: i32) -> (i32, i32) {
    %c0_i32 = arith.constant 0 : i32
    %c0_i32_0 = arith.constant 0 : i32
    return %arg0, %c0_i32 : i32, i32
  }
}

</mosaic_0001>

<llo_original>
// kernel: tpu_custom_call.1
$region0: #{tpu_custom_call.1}
  #allocation0 [shape = 'u32[]', space=smem, size = 0x4, offset = 0x4, fixed_abs, tag = 'smem constant byte address 0x4 - core index']
  #allocation1 [shape = 'u32[72,128]{1,0:T(1,128)}', space=vmem, size = 0x9000, scoped, tag = 'internal scratch']
  %s0 = inlined_call_operand.vmem [shape: f32[8,2], index: 0, kind: input, shape index: {}]
  %s1 = inlined_call_operand.vmem [shape: f32[2,64], index: 1, kind: input, shape index: {}]
  %s2 = inlined_call_operand.vmem [shape: f32[1,64], index: 2, kind: input, shape index: {}]
  %s3 = inlined_call_operand.vmem [shape: f32[64,64], index: 3, kind: input, shape index: {}]
  %s4 = inlined_call_operand.vmem [shape: f32[1,64], index: 4, kind: input, shape index: {}]
  %s5 = inlined_call_operand.vmem [shape: f32[64,3], index: 5, kind: input, shape index: {}]
  %s6 = inlined_call_operand.vmem [shape: f32[1,3], index: 6, kind: input, shape index: {}]
  %s7 = inlined_call_operand.vmem [shape: f32[8,3], index: 7, kind: output, shape index: {}]
  %s8 = sld [smem:[#allocation0]]
  $region38: #{tpu_custom_call.1} parent=0
    _
  %s10 = ssub.s32 1, %s8
  %s11 = scalar_select 0, %s10, %s8
  // Predicated region
  $region2: #{tpu_custom_call.1} parent=0 // pred_check
    _
  $region3: #{tpu_custom_call.1} parent=0 // pred_check_branch
    %13 = sbr.rel (0) target = $region5
  $region4: #{tpu_custom_call.1} parent=0 // pred_region
    _
  $region5: #{tpu_custom_call.1} parent=0 // pred_fallthru
    _
  // Predicated region
  $region6: #{tpu_custom_call.1} parent=0 // pred_check
    _
  $region7: #{tpu_custom_call.1} parent=0 // pred_check_branch
    %15 = sbr.rel (0) target = $region9
  $region8: #{tpu_custom_call.1} parent=0 // pred_region
    _
  $region9: #{tpu_custom_call.1} parent=0 // pred_fallthru
    _
  // Predicated region
  $region10: #{tpu_custom_call.1} parent=0 // pred_check
    _
  $region11: #{tpu_custom_call.1} parent=0 // pred_check_branch
    %17 = sbr.rel (0) target = $region13
  $region12: #{tpu_custom_call.1} parent=0 // pred_region
    _
  $region13: #{tpu_custom_call.1} parent=0 // pred_fallthru
    _
  // Predicated region
  $region14: #{tpu_custom_call.1} parent=0 // pred_check
    _
  $region15: #{tpu_custom_call.1} parent=0 // pred_check_branch
    %19 = sbr.rel (0) target = $region17
  $region16: #{tpu_custom_call.1} parent=0 // pred_region
    _
  $region17: #{tpu_custom_call.1} parent=0 // pred_fallthru
    _
  // Predicated region
  $region18: #{tpu_custom_call.1} parent=0 // pred_check
    _
  $region19: #{tpu_custom_call.1} parent=0 // pred_check_branch
    %21 = sbr.rel (0) target = $region21
  $region20: #{tpu_custom_call.1} parent=0 // pred_region
    _
  $region21: #{tpu_custom_call.1} parent=0 // pred_fallthru
    _
  // Predicated region
  $region22: #{tpu_custom_call.1} parent=0 // pred_check
    _
  $region23: #{tpu_custom_call.1} parent=0 // pred_check_branch
    %23 = sbr.rel (0) target = $region25
  $region24: #{tpu_custom_call.1} parent=0 // pred_region
    _
  $region25: #{tpu_custom_call.1} parent=0 // pred_fallthru
    _
  // Predicated region
  $region26: #{tpu_custom_call.1} parent=0 // pred_check
    _
  $region27: #{tpu_custom_call.1} parent=0 // pred_check_branch
    %25 = sbr.rel (0) target = $region29
  $region28: #{tpu_custom_call.1} parent=0 // pred_region
    _
  $region29: #{tpu_custom_call.1} parent=0 // pred_fallthru
    _
  %v26 = vld [vmem:[%s0] sm:$0xff]
  %v27 = vld [vmem:[%s1] sm:$0x3]
  %29 = vset.pattern.permute.xlu0 0
  %30 = vperm.xlu0 %29, %v26
  %v31 = vpop.permute.xlu0 %30
  %v33 = vperm.slane %v27, 0
  %v34 = vmul.f32 %v31, %v33
  %35 = vset.pattern.permute.xlu0 1
  %36 = vperm.xlu0 %35, %v26
  %v37 = vpop.permute.xlu0 %36
  %v39 = vperm.slane %v27, 1
  %v40 = vmul.f32 %v37, %v39
  %v41 = vadd.f32 %v34, %v40
  %v42 = vld [vmem:[%s2] sm:$0x1]
  %v44 = vperm.slane %v42, 0
  %v46 = vadd.f32 %v41, %v44
  %v47 = vmax.f32 %v46, 0.0
  %v48 = vld [vmem:[%s3] sm:$0xff]
  %v49 = vld [vmem:[%s3 + $0x8] sm:$0xff]
  %v50 = vld [vmem:[%s3 + $0x10] sm:$0xff]
  %v51 = vld [vmem:[%s3 + $0x18] sm:$0xff]
  %v52 = vld [vmem:[%s3 + $0x20] sm:$0xff]
  %v53 = vld [vmem:[%s3 + $0x28] sm:$0xff]
  %v54 = vld [vmem:[%s3 + $0x30] sm:$0xff]
  %v55 = vld [vmem:[%s3 + $0x38] sm:$0xff]
  %v56 = vld [vmem:[%s4] sm:$0x1]
  %v58 = vperm.slane %v56, 0
  %vm60 = vcmask 523264
  %v62 = vsel %vm60, %v47, 0
  %64 = vmatpush.msra.mxu0 0.0
  %65 = vmatpush.msra.mxu0 0.0
  %66 = vmatpush.msra.mxu0 0.0
  %67 = vmatpush.msra.mxu0 0.0
  %68 = vmatpush.msra.mxu0 0.0
  %69 = vmatpush.msra.mxu0 0.0
  %70 = vmatpush.msra.mxu0 0.0
  %71 = vmatpush.msra.mxu0 0.0
  %72 = vmatpush.msra.mxu0 %v55
  %73 = vmatpush.msra.mxu0 %v54
  %74 = vmatpush.msra.mxu0 %v53
  %75 = vmatpush.msra.mxu0 %v52
  %76 = vmatpush.msra.mxu0 %v51
  %77 = vmatpush.msra.mxu0 %v50
  %78 = vmatpush.msra.mxu0 %v49
  %79 = vmatpush.msra.mxu0 %v48
  %80 = vmatmul.f32.gmra.mxu0 %v62
  %v81 = vpop.f32.mrf.mxu0
  %v82 = vadd.f32 %v58, %v81
  %83 = vdwg.mxu0
  %v84 = vmax.f32 %v82, 0.0
  %v85 = vld [vmem:[%s5] sm:$0xff]
  %v86 = vld [vmem:[%s5 + $0x8] sm:$0xff]
  %v87 = vld [vmem:[%s5 + $0x10] sm:$0xff]
  %v88 = vld [vmem:[%s5 + $0x18] sm:$0xff]
  %v89 = vld [vmem:[%s5 + $0x20] sm:$0xff]
  %v90 = vld [vmem:[%s5 + $0x28] sm:$0xff]
  %v91 = vld [vmem:[%s5 + $0x30] sm:$0xff]
  %v92 = vld [vmem:[%s5 + $0x38] sm:$0xff]
  %v93 = vld [vmem:[%s6] sm:$0x1]
  %v95 = vperm.slane %v93, 0
  %v98 = vsel %vm60, %v84, 0
  %100 = vmatpush.msra.mxu0 0.0
  %101 = vmatpush.msra.mxu0 0.0
  %102 = vmatpush.msra.mxu0 0.0
  %103 = vmatpush.msra.mxu0 0.0
  %104 = vmatpush.msra.mxu0 0.0
  %105 = vmatpush.msra.mxu0 0.0
  %106 = vmatpush.msra.mxu0 0.0
  %107 = vmatpush.msra.mxu0 0.0
  %108 = vmatpush.msra.mxu0 %v92
  %109 = vmatpush.msra.mxu0 %v91
  %110 = vmatpush.msra.mxu0 %v90
  %111 = vmatpush.msra.mxu0 %v89
  %112 = vmatpush.msra.mxu0 %v88
  %113 = vmatpush.msra.mxu0 %v87
  %114 = vmatpush.msra.mxu0 %v86
  %115 = vmatpush.msra.mxu0 %v85
  %116 = vmatmul.f32.gmra.mxu0 %v98
  %v117 = vpop.f32.mrf.mxu0
  %v118 = vadd.f32 %v95, %v117
  %119 = vdwg.mxu0
  %vm120 = vcmask 23552
  %121 = vst.msk [vmem:[%s7] sm:$0xff] %vm120, %v118
  // Predicated region
  $region30: #{tpu_custom_call.1} parent=0 // pred_check
    _
  $region31: #{tpu_custom_call.1} parent=0 // pred_check_branch
    %123 = sbr.rel (0) target = $region33
  $region32: #{tpu_custom_call.1} parent=0 // pred_region
    _
  $region33: #{tpu_custom_call.1} parent=0 // pred_fallthru
    _
  // Predicated region
  $region34: #{tpu_custom_call.1} parent=0 // pred_check
    _
  $region35: #{tpu_custom_call.1} parent=0 // pred_check_branch
    %125 = sbr.rel (0) target = $region37
  $region36: #{tpu_custom_call.1} parent=0 // pred_region
    _
  $region37: #{tpu_custom_call.1} parent=0 // pred_fallthru
    _

</llo_original>
